<compile_context>
chip_gen: v7x
topology: tpu7x:2x2x1
jax: 0.10.0
libtpu: 0.0.40
codegen_flags: <defaults>
</compile_context>

<pallas_src>
import jax
import jax.numpy as jnp
from jax.experimental import pallas as pl
from jax.experimental.pallas import tpu as pltpu


def _round_up(x, m):
    return ((x + m - 1) // m) * m


def _adapter_kernel(scale_ref, x_ref, y_ref, dw_ref, db_ref, uw_ref, ub_ref,
                    o_ref):
    scale = scale_ref[0, 0]
    # down_proj on the MXU, f32 accumulation.  Any operand downcast happens on
    # the VMEM tile (free VPU filler under the memory roofline).
    h = jnp.dot(x_ref[...].astype(dw_ref.dtype), dw_ref[...],
                preferred_element_type=jnp.float32) + db_ref[...]
    h = jnp.maximum(h, 0.0)
    # up_proj on the MXU, f32 accumulation.
    adapter = jnp.dot(h.astype(uw_ref.dtype), uw_ref[...],
                      preferred_element_type=jnp.float32) + ub_ref[...]
    # Residual stays at native precision end-to-end; widen once for the add,
    # downcast once at the store.
    o_ref[...] = (y_ref[...].astype(jnp.float32)
                  + scale * adapter).astype(o_ref.dtype)


def _choose_row_tile(n_rows, e_pad, b_pad, x_bytes, y_bytes, out_bytes,
                     w_bytes, vmem_cap):
    """Largest MXU-friendly row tile whose working set fits the VMEM budget,
    while keeping >=4 grid steps on medium/large inputs."""
    # Double-buffered x / y / out tiles plus the in-kernel f32 temporaries
    # (f32 matmul result + widened residual [e_pad], f32 h [b_pad]).
    per_row = 2 * (x_bytes + y_bytes + out_bytes) * e_pad \
        + 4 * (2 * e_pad + b_pad)
    # Grid-invariant weights are single-buffered (pl.Buffered(1)); biases f32.
    weight_bytes = 2 * e_pad * b_pad * w_bytes + (e_pad + b_pad) * 4

    budget = int(0.75 * vmem_cap)            # headroom for spills / scratch
    avail = budget - weight_bytes
    if avail < per_row * 8:
        # TODO(synk): for huge adapters on v7x (64 MiB VMEM) add a second
        # "arbitrary" grid axis splitting e_pad with an h accumulator in VMEM
        # scratch instead of degrading to 8-row tiles.
        avail = per_row * 8
    max_rows = avail // per_row

    if max_rows >= 256:
        tile = (max_rows // 256) * 256       # fill the MXU M dimension
    else:
        tile = max(8, (max_rows // 8) * 8)

    # Keep >=4 grid steps on medium/large inputs so both v7x TensorCores get
    # work and DMA/compute overlap exists.
    if n_rows > 512:
        tile = min(tile, max(256, _round_up(pl.cdiv(n_rows, 4), 256)))

    # Never use a tile (much) larger than the problem.
    tile = min(tile, _round_up(n_rows, 8))
    return max(8, tile), per_row, weight_bytes


def scaled_parallel_adapter(x, y, down_w, down_b, up_w, up_b,
                            scaling_factor=1.0, *, mxu_dtype=None,
                            out_dtype=None, row_tile=None):
    """x, y: [batch, seq, embed].
    down_w: [bottleneck, embed] (torch nn.Linear layout), down_b: [bottleneck],
    up_w:   [embed, bottleneck],                          up_b:   [embed].
    mxu_dtype: optional dtype for the matmul operands (bf16 recommended on
    v5e); HBM traffic, residual add and accumulation stay full precision.
    out_dtype: optional output dtype (bf16 saves 1/3 of HBM traffic)."""
    batch, seq, embed_dim = x.shape
    bottleneck_dim = down_w.shape[0]
    n_rows = batch * seq
    if out_dtype is None:
        out_dtype = y.dtype
    w_dtype = jnp.dtype(mxu_dtype) if mxu_dtype is not None else x.dtype

    # Lane-align both feature dims to 128 (weights always; activations only
    # when embed_dim itself is unaligned).
    e_pad = _round_up(embed_dim, 128)
    b_pad = _round_up(bottleneck_dim, 128)
    feature_padded = (e_pad != embed_dim)

    # [B,S,E] -> [N,E] is a metadata-only reshape -- no HBM pass.
    x2 = x.reshape(n_rows, embed_dim)
    y2 = y.reshape(n_rows, embed_dim)
    if feature_padded:
        # Fallback path for non-128-aligned embed dims only.
        x2 = jnp.pad(x2, ((0, 0), (0, e_pad - embed_dim)))
        y2 = jnp.pad(y2, ((0, 0), (0, e_pad - embed_dim)))

    # Weights/biases are tiny relative to the activations: transpose to
    # [in, out], pad, cast once in the wrapper.
    dw_t = jnp.pad(down_w.T.astype(w_dtype),
                   ((0, e_pad - embed_dim), (0, b_pad - bottleneck_dim)))
    uw_t = jnp.pad(up_w.T.astype(w_dtype),
                   ((0, b_pad - bottleneck_dim), (0, e_pad - embed_dim)))
    db2 = jnp.pad(down_b.astype(jnp.float32),
                  (0, b_pad - bottleneck_dim)).reshape(1, b_pad)
    ub2 = jnp.pad(up_b.astype(jnp.float32),
                  (0, e_pad - embed_dim)).reshape(1, e_pad)
    scale2 = jnp.asarray(scaling_factor, dtype=jnp.float32).reshape(1, 1)

    # Per-generation VMEM capacity (v5e/v6e 128 MiB, v7x 64 MiB per core).
    try:
        vmem_cap = int(pltpu.get_tpu_info().vmem_capacity_bytes)
    except Exception:
        vmem_cap = 64 * 1024 * 1024          # conservative fallback

    tile, per_row, weight_bytes = _choose_row_tile(
        n_rows, e_pad, b_pad,
        x2.dtype.itemsize, y2.dtype.itemsize, jnp.dtype(out_dtype).itemsize,
        jnp.dtype(w_dtype).itemsize, vmem_cap)
    if row_tile is not None:
        tile = max(8, _round_up(int(row_tile), 8))

    # Rows are NOT padded: Pallas masks the ragged last row-block.
    grid = (pl.cdiv(n_rows, tile),)

    footprint = tile * per_row + weight_bytes
    vmem_limit = int(min(max(footprint + (8 << 20), 32 << 20),
                         int(0.96 * vmem_cap)))

    def _const(shape):
        # Grid-invariant operand: resident in VMEM, single-buffered.
        idx = lambda i: (0, 0)
        try:
            return pl.BlockSpec(shape, idx, pipeline_mode=pl.Buffered(1))
        except TypeError:                     # older BlockSpec signature
            return pl.BlockSpec(shape, idx)

    out2 = pl.pallas_call(
        _adapter_kernel,
        out_shape=jax.ShapeDtypeStruct((n_rows, e_pad), out_dtype),
        grid_spec=pltpu.PrefetchScalarGridSpec(
            num_scalar_prefetch=0,
            grid=grid,
            in_specs=[
                pl.BlockSpec(memory_space=pltpu.MemorySpace.SMEM),  # scaling
                pl.BlockSpec((tile, e_pad), lambda i: (i, 0)),      # x
                pl.BlockSpec((tile, e_pad), lambda i: (i, 0)),      # y
                _const((e_pad, b_pad)),                             # down_w.T
                _const((1, b_pad)),                                 # down_b
                _const((b_pad, e_pad)),                             # up_w.T
                _const((1, e_pad)),                                 # up_b
            ],
            out_specs=pl.BlockSpec((tile, e_pad), lambda i: (i, 0)),
        ),
        compiler_params=pltpu.CompilerParams(
            dimension_semantics=("parallel",),
            vmem_limit_bytes=vmem_limit),
    )(scale2, x2, y2, dw_t, db2, uw_t, ub2)

    if feature_padded:
        out2 = out2[:, :embed_dim]
    return out2.reshape(batch, seq, embed_dim)


def _reference(x, y, down_w, down_b, up_w, up_b, scaling_factor):
    h = jnp.maximum(x @ down_w.T + down_b, 0.0)
    adapter_out = h @ up_w.T + up_b
    return y + scaling_factor * adapter_out


if __name__ == "__main__":
    key = jax.random.PRNGKey(0)

    # ---- case 1: small module-spec shapes (unaligned feature dims -> pad path)
    batch, seq = 2, 8
    embed_dim, bottleneck_dim = 32, 16
    scaling_factor = 2.0

    kx, ky, k1, k2, k3, k4 = jax.random.split(key, 6)
    x = jax.random.normal(kx, (batch, seq, embed_dim), dtype=jnp.float32)
    y = jax.random.normal(ky, (batch, seq, embed_dim), dtype=jnp.float32)
    down_w = jax.random.normal(k1, (bottleneck_dim, embed_dim),
                               dtype=jnp.float32) * 0.1
    down_b = jax.random.normal(k2, (bottleneck_dim,), dtype=jnp.float32) * 0.1
    up_w = jax.random.normal(k3, (embed_dim, bottleneck_dim),
                             dtype=jnp.float32) * 0.1
    up_b = jax.random.normal(k4, (embed_dim,), dtype=jnp.float32) * 0.1

    out = scaled_parallel_adapter(x, y, down_w, down_b, up_w, up_b,
                                  scaling_factor)
    jax.block_until_ready(out)
    ref = _reference(x, y, down_w, down_b, up_w, up_b, scaling_factor)
    assert out.shape == ref.shape
    assert jnp.allclose(out, ref, atol=1e-5, rtol=1e-5), \
        "mismatch vs reference (f32, padded-feature path)"

    # ---- case 2: 128-aligned embed + ragged rows (zero-copy pass-through path)
    batch2, seq2 = 2, 25
    embed2, bott2 = 256, 64
    kx, ky, k1, k2, k3, k4 = jax.random.split(jax.random.PRNGKey(1), 6)
    x2 = jax.random.normal(kx, (batch2, seq2, embed2), dtype=jnp.float32)
    y2 = jax.random.normal(ky, (batch2, seq2, embed2), dtype=jnp.float32)
    dw2 = jax.random.normal(k1, (bott2, embed2), dtype=jnp.float32) * 0.05
    db2 = jax.random.normal(k2, (bott2,), dtype=jnp.float32) * 0.05
    uw2 = jax.random.normal(k3, (embed2, bott2), dtype=jnp.float32) * 0.05
    ub2 = jax.random.normal(k4, (embed2,), dtype=jnp.float32) * 0.05

    out2 = scaled_parallel_adapter(x2, y2, dw2, db2, uw2, ub2, 0.5)
    jax.block_until_ready(out2)
    ref2 = _reference(x2, y2, dw2, db2, uw2, ub2, 0.5)
    assert jnp.allclose(out2, ref2, atol=1e-4, rtol=1e-4), \
        "mismatch vs reference (aligned / ragged rows)"

    # ---- case 3: bf16 MXU operands (v5e recommendation); residual stays f32
    out_bf = scaled_parallel_adapter(x, y, down_w, down_b, up_w, up_b,
                                     scaling_factor, mxu_dtype=jnp.bfloat16)
    jax.block_until_ready(out_bf)
    assert jnp.allclose(out_bf, ref, atol=5e-2, rtol=5e-2), \
        "mismatch vs reference (bf16 MXU operands)"

    # ---- case 4: bf16 output store option
    out_o16 = scaled_parallel_adapter(x2, y2, dw2, db2, uw2, ub2, 0.5,
                                      out_dtype=jnp.bfloat16)
    jax.block_until_ready(out_o16)
    assert out_o16.dtype == jnp.bfloat16
    assert jnp.allclose(out_o16.astype(jnp.float32), ref2,
                        atol=5e-2, rtol=5e-2), "mismatch vs reference (bf16 out)"

    print("KERNEL_OK")
</pallas_src>

<mosaic_0001>
module attributes {stable_mosaic.version = 11 : i64} {
  func.func @_adapter_kernel(%arg0: i32, %arg1: memref<1x1xf32, #tpu.memory_space<smem>>, %arg2: memref<16x128xf32, #tpu.memory_space<vmem>>, %arg3: memref<16x128xf32, #tpu.memory_space<vmem>>, %arg4: memref<128x128xf32, #tpu.memory_space<vmem>>, %arg5: memref<1x128xf32, #tpu.memory_space<vmem>>, %arg6: memref<128x128xf32, #tpu.memory_space<vmem>>, %arg7: memref<1x128xf32, #tpu.memory_space<vmem>>, %arg8: memref<16x128xf32, #tpu.memory_space<vmem>>) attributes {dimension_semantics = [#tpu.dimension_semantics<parallel>], iteration_bounds = array<i64: 1>, scalar_prefetch = 0 : i64, scratch_operands = 0 : i64, tpu.core_type = #tpu.core_type<tc>, window_params = [{transform_indices = @transform_0, window_bounds = array<i64: 1, 1>}, {transform_indices = @transform_1, window_bounds = array<i64: 16, 128>}, {transform_indices = @transform_2, window_bounds = array<i64: 16, 128>}, {pipeline_mode = #tpu.pipeline_mode<synchronous>, transform_indices = @transform_3, window_bounds = array<i64: 128, 128>}, {pipeline_mode = #tpu.pipeline_mode<synchronous>, transform_indices = @transform_4, window_bounds = array<i64: 1, 128>}, {pipeline_mode = #tpu.pipeline_mode<synchronous>, transform_indices = @transform_5, window_bounds = array<i64: 128, 128>}, {pipeline_mode = #tpu.pipeline_mode<synchronous>, transform_indices = @transform_6, window_bounds = array<i64: 1, 128>}, {transform_indices = @transform_7, window_bounds = array<i64: 16, 128>}]} {
    %c0 = arith.constant 0 : index
    %c0_0 = arith.constant 0 : index
    %0 = memref.load %arg1[%c0, %c0_0] : memref<1x1xf32, #tpu.memory_space<smem>>
    %c0_1 = arith.constant 0 : index
    %c0_2 = arith.constant 0 : index
    %1 = vector.load %arg2[%c0_1, %c0_2] : memref<16x128xf32, #tpu.memory_space<vmem>>, vector<16x128xf32>
    %c0_3 = arith.constant 0 : index
    %c0_4 = arith.constant 0 : index
    %2 = vector.load %arg4[%c0_3, %c0_4] : memref<128x128xf32, #tpu.memory_space<vmem>>, vector<128x128xf32>
    %cst = arith.constant dense<0.000000e+00> : vector<16x128xf32>
    %3 = tpu.matmul %1, %2, %cst {dimension_numbers = #tpu.dot_dimension_numbers<[1], [0], [0], [1], [0, 0, 1, 1], [], []>} : vector<16x128xf32>, vector<128x128xf32>, vector<16x128xf32> -> vector<16x128xf32>
    %c0_5 = arith.constant 0 : index
    %c0_6 = arith.constant 0 : index
    %4 = vector.load %arg5[%c0_5, %c0_6] : memref<1x128xf32, #tpu.memory_space<vmem>>, vector<1x128xf32>
    %5 = vector.broadcast %4 : vector<1x128xf32> to vector<16x128xf32>
    %6 = arith.addf %3, %5 : vector<16x128xf32>
    %cst_7 = arith.constant 0.000000e+00 : f32
    %7 = vector.broadcast %cst_7 : f32 to vector<16x128xf32>
    %8 = arith.maximumf %6, %7 : vector<16x128xf32>
    %c0_8 = arith.constant 0 : index
    %c0_9 = arith.constant 0 : index
    %9 = vector.load %arg6[%c0_8, %c0_9] : memref<128x128xf32, #tpu.memory_space<vmem>>, vector<128x128xf32>
    %cst_10 = arith.constant dense<0.000000e+00> : vector<16x128xf32>
    %10 = tpu.matmul %8, %9, %cst_10 {dimension_numbers = #tpu.dot_dimension_numbers<[1], [0], [0], [1], [0, 0, 1, 1], [], []>} : vector<16x128xf32>, vector<128x128xf32>, vector<16x128xf32> -> vector<16x128xf32>
    %c0_11 = arith.constant 0 : index
    %c0_12 = arith.constant 0 : index
    %11 = vector.load %arg7[%c0_11, %c0_12] : memref<1x128xf32, #tpu.memory_space<vmem>>, vector<1x128xf32>
    %12 = vector.broadcast %11 : vector<1x128xf32> to vector<16x128xf32>
    %13 = arith.addf %10, %12 : vector<16x128xf32>
    %c0_13 = arith.constant 0 : index
    %c0_14 = arith.constant 0 : index
    %14 = vector.load %arg3[%c0_13, %c0_14] : memref<16x128xf32, #tpu.memory_space<vmem>>, vector<16x128xf32>
    %15 = vector.broadcast %0 : f32 to vector<16x128xf32>
    %16 = arith.mulf %15, %13 : vector<16x128xf32>
    %17 = arith.addf %14, %16 : vector<16x128xf32>
    %c0_15 = arith.constant 0 : index
    %c0_16 = arith.constant 0 : index
    %18 = vector.load %arg8[%c0_15, %c0_16] : memref<16x128xf32, #tpu.memory_space<vmem>>, vector<16x128xf32>
    tpu.vector_store %arg8[%c0_15, %c0_16], %17 {strides = array<i32>} : memref<16x128xf32, #tpu.memory_space<vmem>>, vector<16x128xf32>,
    return
  }
  func.func @transform_0(%arg0: i32) -> (i32, i32) {
    %c0_i32 = arith.constant 0 : i32
    %c0_i32_0 = arith.constant 0 : i32
    %c0_i32_1 = arith.constant 0 : i32
    return %c0_i32, %c0_i32_0 : i32, i32
  }
  func.func @transform_1(%arg0: i32) -> (i32, i32) {
    %c0_i32 = arith.constant 0 : i32
    %c0_i32_0 = arith.constant 0 : i32
    return %arg0, %c0_i32 : i32, i32
  }
  func.func @transform_2(%arg0: i32) -> (i32, i32) {
    %c0_i32 = arith.constant 0 : i32
    %c0_i32_0 = arith.constant 0 : i32
    return %arg0, %c0_i32 : i32, i32
  }
  func.func @transform_3(%arg0: i32) -> (i32, i32) {
    %c0_i32 = arith.constant 0 : i32
    %c0_i32_0 = arith.constant 0 : i32
    %c0_i32_1 = arith.constant 0 : i32
    return %c0_i32, %c0_i32_0 : i32, i32
  }
  func.func @transform_4(%arg0: i32) -> (i32, i32) {
    %c0_i32 = arith.constant 0 : i32
    %c0_i32_0 = arith.constant 0 : i32
    %c0_i32_1 = arith.constant 0 : i32
    return %c0_i32, %c0_i32_0 : i32, i32
  }
  func.func @transform_5(%arg0: i32) -> (i32, i32) {
    %c0_i32 = arith.constant 0 : i32
    %c0_i32_0 = arith.constant 0 : i32
    %c0_i32_1 = arith.constant 0 : i32
    return %c0_i32, %c0_i32_0 : i32, i32
  }
  func.func @transform_6(%arg0: i32) -> (i32, i32) {
    %c0_i32 = arith.constant 0 : i32
    %c0_i32_0 = arith.constant 0 : i32
    %c0_i32_1 = arith.constant 0 : i32
    return %c0_i32, %c0_i32_0 : i32, i32
  }
  func.func @transform_7(%arg0: i32) -> (i32, i32) {
    %c0_i32 = arith.constant 0 : i32
    %c0_i32_0 = arith.constant 0 : i32
    return %arg0, %c0_i32 : i32, i32
  }
}

</mosaic_0001>

<llo_original>
// kernel: tpu_custom_call.1
$region0: #{tpu_custom_call.1}
  #allocation0 [shape = 'u32[]', space=smem, size = 0x4, offset = 0x4, fixed_abs, tag = 'smem constant byte address 0x4 - core index']
  #allocation1 [shape = 'u32[144,128]{1,0:T(1,128)}', space=vmem, size = 0x12000, scoped, tag = 'internal scratch']
  #allocation2 [shape = 'f32[1,1]{1,0:T(1,128)S(6)}', space=smem, size = 0x200, scoped, tag = 'scoped memory for tpu_custom_call.1']
  %s0 = inlined_call_operand.<no memory space> [shape: f32[1,1], index: 0, kind: input, shape index: {}]
  %s1 = inlined_call_operand.hbm [shape: f32[16,128], index: 1, kind: input, shape index: {}]
  %s2 = inlined_call_operand.hbm [shape: f32[16,128], index: 2, kind: input, shape index: {}]
  %s3 = inlined_call_operand.hbm [shape: f32[128,128], index: 3, kind: input, shape index: {}]
  %s4 = inlined_call_operand.vmem [shape: f32[1,128], index: 4, kind: input, shape index: {}]
  %s5 = inlined_call_operand.hbm [shape: f32[128,128], index: 5, kind: input, shape index: {}]
  %s6 = inlined_call_operand.vmem [shape: f32[1,128], index: 6, kind: input, shape index: {}]
  %s7 = inlined_call_operand.hbm [shape: f32[16,128], index: 7, kind: output, shape index: {}]
  %s8 = sld [smem:[#allocation0]]
  $region54: #{tpu_custom_call.1} parent=0
    _
  %s10 = ssub.s32 1, %s8
  %s11 = scalar_select 0, %s10, %s8
  %12 = sst [smem:[#allocation2]] %s0
  $region1: #{tpu_custom_call.1} parent=0
    #allocation3 [shape = 'u8[8192]{0}', space=vmem, size = 0x2000, scoped, tag = 'input window, operand 1, single buffered']
    #allocation4 [shape = 's32[1]{0}', space=sflag, size = 0x4, scoped, tag = 'scoped memory for tpu_custom_call.1']
    #allocation5 [shape = 's32[1]{0}', space=sflag, size = 0x4, scoped, tag = 'scoped memory for tpu_custom_call.1']
    #allocation6 [shape = 'u8[8192]{0}', space=vmem, size = 0x2000, scoped, tag = 'input window, operand 2, single buffered']
    #allocation7 [shape = 's32[1]{0}', space=sflag, size = 0x4, scoped, tag = 'scoped memory for tpu_custom_call.1']
    #allocation8 [shape = 'u8[65536]{0}', space=vmem, size = 0x10000, scoped, tag = 'input window, operand 3, single buffered']
    #allocation9 [shape = 'u8[65536]{0}', space=vmem, size = 0x10000, scoped, tag = 'input window, operand 5, single buffered']
    #allocation10 [shape = 's32[1]{0}', space=sflag, size = 0x4, scoped, tag = 'scoped memory for tpu_custom_call.1']
    #allocation11 [shape = 'u8[8192]{0}', space=vmem, size = 0x2000, scoped, tag = 'output window, operand 0, single buffered']
    %13 = vsyncpa [#allocation4], 0
    %14 = vsyncpa [#allocation7], 0
    %15 = vsyncpa [#allocation10], 0
    %16 = vsyncpa [#allocation5], 0
    // Predicated region
    $region2: #{tpu_custom_call.1} parent=1 // pred_check
      _
    $region3: #{tpu_custom_call.1} parent=1 // pred_check_branch
      %18 = sbr.rel (0) target = $region5
    $region4: #{tpu_custom_call.1} parent=1 // pred_region
      _
    $region5: #{tpu_custom_call.1} parent=1 // pred_fallthru
      _
    // Predicated region
    $region6: #{tpu_custom_call.1} parent=1 // pred_check
      _
    $region7: #{tpu_custom_call.1} parent=1 // pred_check_branch
      %20 = sbr.rel (0) target = $region9
    $region8: #{tpu_custom_call.1} parent=1 // pred_region
      %s22 = ssub.s32 256, 256
      %23 = vsyncadd [#allocation4], %s22
      %s24 = sshll.u32 [#allocation3], 4
      %s25 = int_to_ptr.vmem [resolvable:$true] %s24
      %30 = dma.hbm_to_vmem [thread:$0]  %s1, 256, %s25, [#allocation4], 128, 128, 8
    $region9: #{tpu_custom_call.1} parent=1 // pred_fallthru
      _
    // Predicated region
    $region10: #{tpu_custom_call.1} parent=1 // pred_check
      _
    $region11: #{tpu_custom_call.1} parent=1 // pred_check_branch
      %32 = sbr.rel (0) target = $region13
    $region12: #{tpu_custom_call.1} parent=1 // pred_region
      %s34 = ssub.s32 256, 256
      %35 = vsyncadd [#allocation7], %s34
      %s36 = sshll.u32 [#allocation6], 4
      %s37 = int_to_ptr.vmem [resolvable:$true] %s36
      %42 = dma.hbm_to_vmem [thread:$0]  %s2, 256, %s37, [#allocation7], 128, 128, 8
    $region13: #{tpu_custom_call.1} parent=1 // pred_fallthru
      _
    // Predicated region
    $region14: #{tpu_custom_call.1} parent=1 // pred_check
      _
    $region15: #{tpu_custom_call.1} parent=1 // pred_check_branch
      %44 = sbr.rel (0) target = $region17
    $region16: #{tpu_custom_call.1} parent=1 // pred_region
      %s46 = ssub.s32 2048, 2048
      %47 = vsyncadd [#allocation7], %s46
      %s48 = sshll.u32 [#allocation8], 4
      %s49 = int_to_ptr.vmem [resolvable:$true] %s48
      %54 = dma.hbm_to_vmem [thread:$0]  %s3, 2048, %s49, [#allocation7], 128, 128, 8
    $region17: #{tpu_custom_call.1} parent=1 // pred_fallthru
      _
    // Predicated region
    $region18: #{tpu_custom_call.1} parent=1 // pred_check
      _
    $region19: #{tpu_custom_call.1} parent=1 // pred_check_branch
      %56 = sbr.rel (0) target = $region21
    $region20: #{tpu_custom_call.1} parent=1 // pred_region
      _
    $region21: #{tpu_custom_call.1} parent=1 // pred_fallthru
      _
    // Predicated region
    $region22: #{tpu_custom_call.1} parent=1 // pred_check
      _
    $region23: #{tpu_custom_call.1} parent=1 // pred_check_branch
      %58 = sbr.rel (0) target = $region25
    $region24: #{tpu_custom_call.1} parent=1 // pred_region
      %s60 = ssub.s32 2048, 2048
      %61 = vsyncadd [#allocation10], %s60
      %s62 = sshll.u32 [#allocation9], 4
      %s63 = int_to_ptr.vmem [resolvable:$true] %s62
      %68 = dma.hbm_to_vmem [thread:$0]  %s5, 2048, %s63, [#allocation10], 128, 128, 8
    $region25: #{tpu_custom_call.1} parent=1 // pred_fallthru
      _
    // Predicated region
    $region26: #{tpu_custom_call.1} parent=1 // pred_check
      _
    $region27: #{tpu_custom_call.1} parent=1 // pred_check_branch
      %70 = sbr.rel (0) target = $region29
    $region28: #{tpu_custom_call.1} parent=1 // pred_region
      _
    $region29: #{tpu_custom_call.1} parent=1 // pred_fallthru
      _
    // Predicated region
    $region30: #{tpu_custom_call.1} parent=1 // pred_check
      _
    $region31: #{tpu_custom_call.1} parent=1 // pred_check_branch
      %72 = sbr.rel (0) target = $region33
    $region32: #{tpu_custom_call.1} parent=1 // pred_region
      %73 = dma.done [#allocation4], 256
    $region33: #{tpu_custom_call.1} parent=1 // pred_fallthru
      _
    // Predicated region
    $region34: #{tpu_custom_call.1} parent=1 // pred_check
      _
    $region35: #{tpu_custom_call.1} parent=1 // pred_check_branch
      %75 = sbr.rel (0) target = $region37
    $region36: #{tpu_custom_call.1} parent=1 // pred_region
      %76 = dma.done [#allocation7], 256
    $region37: #{tpu_custom_call.1} parent=1 // pred_fallthru
      _
    // Predicated region
    $region38: #{tpu_custom_call.1} parent=1 // pred_check
      _
    $region39: #{tpu_custom_call.1} parent=1 // pred_check_branch
      %78 = sbr.rel (0) target = $region41
    $region40: #{tpu_custom_call.1} parent=1 // pred_region
      %79 = dma.done [#allocation7], 2048
    $region41: #{tpu_custom_call.1} parent=1 // pred_fallthru
      _
    // Predicated region
    $region42: #{tpu_custom_call.1} parent=1 // pred_check
      _
    $region43: #{tpu_custom_call.1} parent=1 // pred_check_branch
      %81 = sbr.rel (0) target = $region45
    $region44: #{tpu_custom_call.1} parent=1 // pred_region
      %82 = dma.done [#allocation10], 2048
    $region45: #{tpu_custom_call.1} parent=1 // pred_fallthru
      _
    %s83 = sld [smem:[#allocation2]]
    %v84 = vld [vmem:[#allocation3] sm:$0xff]
    %v85 = vld [vmem:[#allocation3 + $0x8] sm:$0xff]
    %v86 = vld [vmem:[#allocation8] sm:$0xff]
    %v87 = vld [vmem:[#allocation8 + $0x8] sm:$0xff]
    %v88 = vld [vmem:[#allocation8 + $0x10] sm:$0xff]
    %v89 = vld [vmem:[#allocation8 + $0x18] sm:$0xff]
    %v90 = vld [vmem:[#allocation8 + $0x20] sm:$0xff]
    %v91 = vld [vmem:[#allocation8 + $0x28] sm:$0xff]
    %v92 = vld [vmem:[#allocation8 + $0x30] sm:$0xff]
    %v93 = vld [vmem:[#allocation8 + $0x38] sm:$0xff]
    %v94 = vld [vmem:[#allocation8 + $0x40] sm:$0xff]
    %v95 = vld [vmem:[#allocation8 + $0x48] sm:$0xff]
    %v96 = vld [vmem:[#allocation8 + $0x50] sm:$0xff]
    %v97 = vld [vmem:[#allocation8 + $0x58] sm:$0xff]
    %v98 = vld [vmem:[#allocation8 + $0x60] sm:$0xff]
    %v99 = vld [vmem:[#allocation8 + $0x68] sm:$0xff]
    %v100 = vld [vmem:[#allocation8 + $0x70] sm:$0xff]
    %v101 = vld [vmem:[#allocation8 + $0x78] sm:$0xff]
    %v102 = vld [vmem:[%s4] sm:$0x1]
    %v104 = vlaneseq
    %v105 = vshrl.u32 %v104, 7
    %v106 = vsub.s32 0, %v105
    %v107 = vrot.slane %v102, %v106
    %109 = vmatprep.subr.mxu0 0.0
    %110 = vmatpush1.msra.mxu0 %v86
    %111 = vmatprep.subr.mxu0 0.0
    %112 = vmatpush1.msra.mxu0 %v87
    %113 = vmatprep.subr.mxu0 0.0
    %114 = vmatpush1.msra.mxu0 %v88
    %115 = vmatprep.subr.mxu0 0.0
    %116 = vmatpush1.msra.mxu0 %v89
    %117 = vmatprep.subr.mxu0 0.0
    %118 = vmatpush1.msra.mxu0 %v90
    %119 = vmatprep.subr.mxu0 0.0
    %120 = vmatpush1.msra.mxu0 %v91
    %121 = vmatprep.subr.mxu0 0.0
    %122 = vmatpush1.msra.mxu0 %v92
    %123 = vmatprep.subr.mxu0 0.0
    %124 = vmatpush1.msra.mxu0 %v93
    %125 = vmatprep.subr.mxu0 0.0
    %126 = vmatpush1.msra.mxu0 %v94
    %127 = vmatprep.subr.mxu0 0.0
    %128 = vmatpush1.msra.mxu0 %v95
    %129 = vmatprep.subr.mxu0 0.0
    %130 = vmatpush1.msra.mxu0 %v96
    %131 = vmatprep.subr.mxu0 0.0
    %132 = vmatpush1.msra.mxu0 %v97
    %133 = vmatprep.subr.mxu0 0.0
    %134 = vmatpush1.msra.mxu0 %v98
    %135 = vmatprep.subr.mxu0 0.0
    %136 = vmatpush1.msra.mxu0 %v99
    %137 = vmatprep.subr.mxu0 0.0
    %138 = vmatpush1.msra.mxu0 %v100
    %139 = vmatprep.subr.mxu0 0.0
    %140 = vmatpush1.msra.mxu0 %v101
    %141 = vmatprep.subr.mxu0 0.0
    %142 = vmatpush1.msra.mxu0 0.0
    %143 = vmatprep.subr.mxu0 0.0
    %144 = vmatpush1.msra.mxu0 0.0
    %145 = vmatprep.subr.mxu0 0.0
    %146 = vmatpush1.msra.mxu0 0.0
    %147 = vmatprep.subr.mxu0 0.0
    %148 = vmatpush1.msra.mxu0 0.0
    %149 = vmatprep.subr.mxu0 0.0
    %150 = vmatpush1.msra.mxu0 0.0
    %151 = vmatprep.subr.mxu0 0.0
    %152 = vmatpush1.msra.mxu0 0.0
    %153 = vmatprep.subr.mxu0 0.0
    %154 = vmatpush1.msra.mxu0 0.0
    %155 = vmatprep.subr.mxu0 0.0
    %156 = vmatpush1.msra.mxu0 0.0
    %157 = vmatprep.subr.mxu0 0.0
    %158 = vmatpush1.msra.mxu0 0.0
    %159 = vmatprep.subr.mxu0 0.0
    %160 = vmatpush1.msra.mxu0 0.0
    %161 = vmatprep.subr.mxu0 0.0
    %162 = vmatpush1.msra.mxu0 0.0
    %163 = vmatprep.subr.mxu0 0.0
    %164 = vmatpush1.msra.mxu0 0.0
    %165 = vmatprep.subr.mxu0 0.0
    %166 = vmatpush1.msra.mxu0 0.0
    %167 = vmatprep.subr.mxu0 0.0
    %168 = vmatpush1.msra.mxu0 0.0
    %169 = vmatprep.subr.mxu0 0.0
    %170 = vmatpush1.msra.mxu0 0.0
    %171 = vmatprep.subr.mxu0 0.0
    %172 = vmatpush1.msra.mxu0 0.0
    %173 = vmatprep.mubr.f32.mxu0 0.0
    %174 = vmatmul.mubr.f32.gmra.mrb[0].mxu0 %v84
    %v175 = vpop.f32.mrb[0].mxu0
    %v176 = vadd.f32 %v107, %v175
    %v177 = vpop.f32.mrb[0].mxu0
    %178 = vmatprep.mubr.f32.mxu0 0.0
    %179 = vmatmul.mubr.f32.gmra.mrb[0].mxu0 %v85
    %v180 = vpop.f32.mrb[0].mxu0
    %v181 = vadd.f32 %v107, %v180
    %v182 = vpop.f32.mrb[0].mxu0
    %183 = vdwg.mxu0
    %v184 = vmax.f32 %v176, 0.0
    %v185 = vmax.f32 %v181, 0.0
    %v186 = vld [vmem:[#allocation9] sm:$0xff]
    %v187 = vld [vmem:[#allocation9 + $0x8] sm:$0xff]
    %v188 = vld [vmem:[#allocation9 + $0x10] sm:$0xff]
    %v189 = vld [vmem:[#allocation9 + $0x18] sm:$0xff]
    %v190 = vld [vmem:[#allocation9 + $0x20] sm:$0xff]
    %v191 = vld [vmem:[#allocation9 + $0x28] sm:$0xff]
    %v192 = vld [vmem:[#allocation9 + $0x30] sm:$0xff]
    %v193 = vld [vmem:[#allocation9 + $0x38] sm:$0xff]
    %v194 = vld [vmem:[#allocation9 + $0x40] sm:$0xff]
    %v195 = vld [vmem:[#allocation9 + $0x48] sm:$0xff]
    %v196 = vld [vmem:[#allocation9 + $0x50] sm:$0xff]
    %v197 = vld [vmem:[#allocation9 + $0x58] sm:$0xff]
    %v198 = vld [vmem:[#allocation9 + $0x60] sm:$0xff]
    %v199 = vld [vmem:[#allocation9 + $0x68] sm:$0xff]
    %v200 = vld [vmem:[#allocation9 + $0x70] sm:$0xff]
    %v201 = vld [vmem:[#allocation9 + $0x78] sm:$0xff]
    %v202 = vld [vmem:[%s6] sm:$0x1]
    %v204 = vlaneseq
    %v205 = vshrl.u32 %v204, 7
    %v206 = vsub.s32 0, %v205
    %v207 = vrot.slane %v202, %v206
    %209 = vmatprep.subr.mxu0 0.0
    %210 = vmatpush1.msra.mxu0 %v186
    %211 = vmatprep.subr.mxu0 0.0
    %212 = vmatpush1.msra.mxu0 %v187
    %213 = vmatprep.subr.mxu0 0.0
    %214 = vmatpush1.msra.mxu0 %v188
    %215 = vmatprep.subr.mxu0 0.0
    %216 = vmatpush1.msra.mxu0 %v189
    %217 = vmatprep.subr.mxu0 0.0
    %218 = vmatpush1.msra.mxu0 %v190
    %219 = vmatprep.subr.mxu0 0.0
    %220 = vmatpush1.msra.mxu0 %v191
    %221 = vmatprep.subr.mxu0 0.0
    %222 = vmatpush1.msra.mxu0 %v192
    %223 = vmatprep.subr.mxu0 0.0
    %224 = vmatpush1.msra.mxu0 %v193
    %225 = vmatprep.subr.mxu0 0.0
    %226 = vmatpush1.msra.mxu0 %v194
    %227 = vmatprep.subr.mxu0 0.0
    %228 = vmatpush1.msra.mxu0 %v195
    %229 = vmatprep.subr.mxu0 0.0
    %230 = vmatpush1.msra.mxu0 %v196
    %231 = vmatprep.subr.mxu0 0.0
    %232 = vmatpush1.msra.mxu0 %v197
    %233 = vmatprep.subr.mxu0 0.0
    %234 = vmatpush1.msra.mxu0 %v198
    %235 = vmatprep.subr.mxu0 0.0
    %236 = vmatpush1.msra.mxu0 %v199
    %237 = vmatprep.subr.mxu0 0.0
    %238 = vmatpush1.msra.mxu0 %v200
    %239 = vmatprep.subr.mxu0 0.0
    %240 = vmatpush1.msra.mxu0 %v201
    %241 = vmatprep.subr.mxu0 0.0
    %242 = vmatpush1.msra.mxu0 0.0
    %243 = vmatprep.subr.mxu0 0.0
    %244 = vmatpush1.msra.mxu0 0.0
    %245 = vmatprep.subr.mxu0 0.0
    %246 = vmatpush1.msra.mxu0 0.0
    %247 = vmatprep.subr.mxu0 0.0
    %248 = vmatpush1.msra.mxu0 0.0
    %249 = vmatprep.subr.mxu0 0.0
    %250 = vmatpush1.msra.mxu0 0.0
    %251 = vmatprep.subr.mxu0 0.0
    %252 = vmatpush1.msra.mxu0 0.0
    %253 = vmatprep.subr.mxu0 0.0
    %254 = vmatpush1.msra.mxu0 0.0
    %255 = vmatprep.subr.mxu0 0.0
    %256 = vmatpush1.msra.mxu0 0.0
    %257 = vmatprep.subr.mxu0 0.0
    %258 = vmatpush1.msra.mxu0 0.0
    %259 = vmatprep.subr.mxu0 0.0
    %260 = vmatpush1.msra.mxu0 0.0
    %261 = vmatprep.subr.mxu0 0.0
    %262 = vmatpush1.msra.mxu0 0.0
    %263 = vmatprep.subr.mxu0 0.0
    %264 = vmatpush1.msra.mxu0 0.0
    %265 = vmatprep.subr.mxu0 0.0
    %266 = vmatpush1.msra.mxu0 0.0
    %267 = vmatprep.subr.mxu0 0.0
    %268 = vmatpush1.msra.mxu0 0.0
    %269 = vmatprep.subr.mxu0 0.0
    %270 = vmatpush1.msra.mxu0 0.0
    %271 = vmatprep.subr.mxu0 0.0
    %272 = vmatpush1.msra.mxu0 0.0
    %273 = vmatprep.mubr.f32.mxu0 0.0
    %274 = vmatmul.mubr.f32.gmra.mrb[0].mxu0 %v184
    %v275 = vpop.f32.mrb[0].mxu0
    %v276 = vadd.f32 %v207, %v275
    %v277 = vpop.f32.mrb[0].mxu0
    %278 = vmatprep.mubr.f32.mxu0 0.0
    %279 = vmatmul.mubr.f32.gmra.mrb[0].mxu0 %v185
    %v280 = vpop.f32.mrb[0].mxu0
    %v281 = vadd.f32 %v207, %v280
    %v282 = vpop.f32.mrb[0].mxu0
    %283 = vdwg.mxu0
    %v284 = vld [vmem:[#allocation6] sm:$0xff]
    %v285 = vld [vmem:[#allocation6 + $0x8] sm:$0xff]
    %v286 = vstv %s83
    %v287 = vmul.f32 %v286, %v276
    %v288 = vmul.f32 %v286, %v281
    %v289 = vadd.f32 %v284, %v287
    %v290 = vadd.f32 %v285, %v288
    %291 = vst [vmem:[#allocation11] sm:$0xff] %v289
    %292 = vst [vmem:[#allocation11 + $0x8] sm:$0xff] %v290
    // Predicated region
    $region46: #{tpu_custom_call.1} parent=1 // pred_check
      _
    $region47: #{tpu_custom_call.1} parent=1 // pred_check_branch
      %294 = sbr.rel (0) target = $region49
    $region48: #{tpu_custom_call.1} parent=1 // pred_region
      %s296 = ssub.s32 256, 256
      %297 = vsyncadd [#allocation5], %s296
      %s298 = sshll.u32 [#allocation11], 4
      %s299 = int_to_ptr.vmem [resolvable:$true] %s298
      %304 = dma.vmem_to_hbm [thread:$0]  %s299, 256, %s7, [#allocation5], 128, 128, 8
    $region49: #{tpu_custom_call.1} parent=1 // pred_fallthru
      _
    // Predicated region
    $region50: #{tpu_custom_call.1} parent=1 // pred_check
      _
    $region51: #{tpu_custom_call.1} parent=1 // pred_check_branch
      %306 = sbr.rel (0) target = $region53
    $region52: #{tpu_custom_call.1} parent=1 // pred_region
      %307 = dma.done [#allocation5], 256
    $region53: #{tpu_custom_call.1} parent=1 // pred_fallthru
      _
    %308 = vsyncpa [#allocation4], 1
    %309 = vsyncpa [#allocation7], 1
    %310 = vsyncpa [#allocation10], 1
    %311 = vsyncpa [#allocation5], 1

</llo_original>
